<compile_context>
chip_gen: v7x
topology: tpu7x:2x2x1
jax: 0.10.0
libtpu: 0.0.40
codegen_flags: <defaults>
</compile_context>

<pallas_src>
import jax
import jax.numpy as jnp
from jax.experimental import pallas as pl
from jax.experimental.pallas import tpu as pltpu


def _row_chunks(n):
    """Static row chunking: up to 4 chunks, chunk starts sublane (8) aligned."""
    if n >= 4 * 8:
        target = 4
    elif n >= 2 * 8:
        target = 2
    else:
        target = 1
    per = -(-n // target)                 # ceil
    per = ((per + 7) // 8) * 8            # keep chunk starts 8-row aligned
    chunks = []
    start = 0
    while start < n:
        rows = min(per, n - start)
        chunks.append((start, rows))
        start += rows
    return chunks


def front_forward(x, *, min_pallas_bytes=1 << 20):
    """JAX/Pallas equivalent of Front.forward.

    x: (N, C, H, W) array.  Returns (N, min(C*H*W, 2048)).
    """
    n = x.shape[0]
    flat = x.reshape(n, -1)               # glue: flatten(start_dim=1)
    flat_dim = flat.shape[1]
    k = min(flat_dim, 2048)               # torch slicing clamps like this
    itemsize = jnp.dtype(flat.dtype).itemsize

    # (1) No slicing needed -> the reshape is free at the HLO level; skip the
    #     kernel and the extra HBM round trip entirely.
    if k == flat_dim:
        return flat

    # (2) Tiny copies are dominated by custom-call launch overhead; let XLA
    #     emit (and fuse) a plain slice instead.
    if n * k * itemsize < min_pallas_bytes:
        return flat[:, :k]

    # (3) Direct HBM->HBM strided DMA (column prefix is a native DMA pattern:
    #     k contiguous elements per row, row stride = flat_dim).
    chunks = _row_chunks(n)
    n_chunks = len(chunks)

    def _prefix_copy_kernel(x_ref, o_ref, sems):
        # x_ref: (n, flat_dim) in HBM; o_ref: (n, k) in HBM.
        copies = [
            pltpu.make_async_copy(
                x_ref.at[pl.ds(s, r), pl.ds(0, k)],
                o_ref.at[pl.ds(s, r), pl.ds(0, k)],
                sems.at[c],
            )
            for c, (s, r) in enumerate(chunks)
        ]
        for cp in copies:      # issue all chunk DMAs (overlap across engines)
            cp.start()
        for cp in copies:      # then drain
            cp.wait()

    out = pl.pallas_call(
        _prefix_copy_kernel,
        out_shape=jax.ShapeDtypeStruct((n, k), flat.dtype),
        in_specs=[pl.BlockSpec(memory_space=pl.ANY)],
        out_specs=pl.BlockSpec(memory_space=pl.ANY),
        scratch_shapes=[pltpu.SemaphoreType.DMA((n_chunks,))],
        cost_estimate=pl.CostEstimate(
            flops=0,
            transcendentals=0,
            bytes_accessed=2 * n * k * itemsize,   # pure memory traffic hint
        ),
    )(flat)
    return out


if __name__ == "__main__":
    key = jax.random.PRNGKey(0)

    # Case 1: module-spec small shape; flat_dim = 1024 <= 2048 -> short-circuit.
    x1 = jax.random.normal(key, (2, 4, 16, 16), dtype=jnp.float32)
    y1 = front_forward(x1)
    jax.block_until_ready(y1)
    ref1 = x1.reshape(2, -1)[:, :2048]
    assert y1.shape == (2, 1024), y1.shape
    assert jnp.array_equal(y1, ref1), "mismatch (case 1: short-circuit)"

    # Case 2: flat_dim > 2048 but tiny output -> fused XLA slice path.
    x2 = jax.random.normal(jax.random.PRNGKey(1), (2, 16, 16, 16),
                           dtype=jnp.float32)
    y2 = front_forward(x2)
    jax.block_until_ready(y2)
    ref2 = x2.reshape(2, -1)[:, :2048]
    assert y2.shape == (2, 2048), y2.shape
    assert jnp.array_equal(y2, ref2), "mismatch (case 2: XLA slice)"

    # Case 3: same input, force the Pallas HBM->HBM DMA kernel (single chunk).
    y3 = front_forward(x2, min_pallas_bytes=0)
    jax.block_until_ready(y3)
    assert y3.shape == (2, 2048), y3.shape
    assert jnp.array_equal(y3, ref2), "mismatch (case 3: DMA kernel, small N)"

    # Case 4: larger batch -> Pallas DMA kernel by default, 4 row-chunk DMAs.
    x4 = jax.random.normal(jax.random.PRNGKey(2), (160, 16, 16, 16),
                           dtype=jnp.float32)
    y4 = front_forward(x4)
    jax.block_until_ready(y4)
    ref4 = x4.reshape(160, -1)[:, :2048]
    assert y4.shape == (160, 2048), y4.shape
    assert jnp.array_equal(y4, ref4), "mismatch (case 4: DMA kernel, 4 chunks)"

    # Case 5: row count not a multiple of 8 -> uneven (partial) last chunk.
    x5 = jax.random.normal(jax.random.PRNGKey(3), (50, 16, 16, 16),
                           dtype=jnp.float32)
    y5 = front_forward(x5, min_pallas_bytes=0)
    jax.block_until_ready(y5)
    ref5 = x5.reshape(50, -1)[:, :2048]
    assert y5.shape == (50, 2048), y5.shape
    assert jnp.array_equal(y5, ref5), "mismatch (case 5: ragged last chunk)"

    print("KERNEL_OK")
</pallas_src>

<mosaic_0001>
module attributes {stable_mosaic.version = 11 : i64} {
  func.func @_prefix_copy_kernel(%arg0: memref<2x4096xf32, #tpu.memory_space<any>>, %arg1: memref<2x2048xf32, #tpu.memory_space<any>>, %arg2: memref<1x!tpu.dma_semaphore, #tpu.memory_space<semaphore_mem>>) attributes {dimension_semantics = [], scalar_prefetch = 0 : i64, scratch_operands = 1 : i64, tpu.core_type = #tpu.core_type<tc>} {
    %c0_i32 = arith.constant 0 : i32
    %c0_i32_0 = arith.constant 0 : i32
    %c0_i32_1 = arith.constant 0 : i32
    %0 = tpu.memref_slice %arg0[%c0_i32_0, %c0_i32_1] : memref<2x4096xf32, #tpu.memory_space<any>> -> memref<2x2048xf32, #tpu.memory_space<any>>
    %c0_i32_2 = arith.constant 0 : i32
    %c0_i32_3 = arith.constant 0 : i32
    %1 = tpu.memref_slice %arg1[%c0_i32_2, %c0_i32_3] : memref<2x2048xf32, #tpu.memory_space<any>> -> memref<2x2048xf32, #tpu.memory_space<any>>
    %2 = tpu.memref_slice %arg2[%c0_i32] : memref<1x!tpu.dma_semaphore, #tpu.memory_space<semaphore_mem>> -> memref<1x!tpu.dma_semaphore, #tpu.memory_space<semaphore_mem>>
    %3 = tpu.memref_squeeze %2 : memref<1x!tpu.dma_semaphore, #tpu.memory_space<semaphore_mem>> -> memref<!tpu.dma_semaphore, #tpu.memory_space<semaphore_mem>>
    tpu.enqueue_dma source(%0 : memref<2x2048xf32, #tpu.memory_space<any>>) target(%1 : memref<2x2048xf32, #tpu.memory_space<any>>) target_semaphore(%3 : memref<!tpu.dma_semaphore, #tpu.memory_space<semaphore_mem>>)
    %c0_i32_4 = arith.constant 0 : i32
    %c0_i32_5 = arith.constant 0 : i32
    %c0_i32_6 = arith.constant 0 : i32
    %4 = tpu.memref_slice %arg0[%c0_i32_5, %c0_i32_6] : memref<2x4096xf32, #tpu.memory_space<any>> -> memref<2x2048xf32, #tpu.memory_space<any>>
    %c0_i32_7 = arith.constant 0 : i32
    %c0_i32_8 = arith.constant 0 : i32
    %5 = tpu.memref_slice %arg1[%c0_i32_7, %c0_i32_8] : memref<2x2048xf32, #tpu.memory_space<any>> -> memref<2x2048xf32, #tpu.memory_space<any>>
    %6 = tpu.memref_slice %arg2[%c0_i32_4] : memref<1x!tpu.dma_semaphore, #tpu.memory_space<semaphore_mem>> -> memref<1x!tpu.dma_semaphore, #tpu.memory_space<semaphore_mem>>
    %7 = tpu.memref_squeeze %6 : memref<1x!tpu.dma_semaphore, #tpu.memory_space<semaphore_mem>> -> memref<!tpu.dma_semaphore, #tpu.memory_space<semaphore_mem>>
    tpu.wait_dma2 semaphore(%7 : memref<!tpu.dma_semaphore, #tpu.memory_space<semaphore_mem>>) src(%4 : memref<2x2048xf32, #tpu.memory_space<any>>) dst(%5 : memref<2x2048xf32, #tpu.memory_space<any>>)
    return
  }
}

</mosaic_0001>

<llo_original>
// kernel: tpu_custom_call.1
$region0: #{tpu_custom_call.1}
  #allocation0 [shape = 'u32[]', space=smem, size = 0x4, offset = 0x4, fixed_abs, tag = 'smem constant byte address 0x4 - core index']
  #allocation1 [shape = 'u32[144,128]{1,0:T(1,128)}', space=vmem, size = 0x12000, scoped, tag = 'internal scratch']
  #allocation2 [shape = 's32[1]{0}', space=sflag, size = 0x4, scoped, tag = 'scratch operand']
  #allocation3 [shape = 's32[]', space=sflag, size = 0x4, offset = 0, fixed_abs, tag = 'sflag constant byte address 0x0 - dummy sync flag']
  #allocation4 [shape = 'u32[0]{0}', space=smem, size = 0, offset = 0, fixed_abs, tag = 'smem constant byte address 0x0 - null']
  %s0 = inlined_call_operand.hbm [shape: f32[2,4096], index: 0, kind: input, shape index: {}]
  %s1 = inlined_call_operand.hbm [shape: f32[2,2048], index: 1, kind: output, shape index: {}]
  %s2 = sld [smem:[#allocation0]]
  $region2: #{tpu_custom_call.1} parent=0
    _
  %s4 = ssub.s32 1, %s2
  %s5 = scalar_select 0, %s4, %s2
  %s7 = sshll.u32 1, 14
  %s8 = sxor.u32 4294967295, %s7
  %s11 = sshll.u32 3, 24
  %s12 = sxor.u32 4294967295, %s11
  %s13 = sand.u32 0, %s12
  %s15 = sor.u32 %s13, 0
  %18 = dma.general %s0, 512, %s1, [#allocation2], [#allocation3], [#allocation4], %s15, 0
  %s19 = smul.u32 2, 1
  %s20 = smul.u32 %s19, 16
  %s21 = sshll.u32 %s20, 4
  %22 = dma.done [#allocation2], %s21
  %23 = vsyncmov [#allocation2]
  %s24 = vpop.sfrf %23
  %p25 = scmp.eq.s32.totalorder %s24, 0
  %p26 = pneg %p25
  %28 = shalt.err (%p26)

</llo_original>
